<compile_context>
chip_gen: v5e
topology: v5e:2x2
jax: 0.10.0
libtpu: 0.0.40
codegen_flags: <defaults>
</compile_context>

<pallas_src>
from functools import partial

import jax
import jax.numpy as jnp
from jax.experimental import pallas as pl
from jax.experimental.pallas import tpu as pltpu

_LANE = 128
_SUBLANE = 8


# ---------------------------------------------------------------------------
# Generation-aware budgets.
# ---------------------------------------------------------------------------
def _vmem_budgets():
    """Byte budgets derived from the chip's VMEM capacity."""
    vmem_cap = 64 << 20  # conservative default (v7x-class)
    try:
        vmem_cap = int(getattr(pltpu.get_tpu_info(), "vmem_capacity_bytes", vmem_cap))
    except Exception:
        pass
    if vmem_cap >= (100 << 20):  # v5e / v6e: 128 MiB physical VMEM
        return {"vmem_limit": 96 << 20, "block_budget": 6 << 20, "fused_slab": 12 << 20}
    # v7x-class: 64 MiB physical VMEM -> keep double-buffered in+out well inside it.
    return {"vmem_limit": 48 << 20, "block_budget": 3 << 20, "fused_slab": 4 << 20}


def _pick_tiles(rows, hw, itemsize, budget_bytes):
    """Pick (row_tile, hw_tile) with row_tile*hw_tile*itemsize ~= budget_bytes.

    row_tile is a multiple of 8 (or the full row extent when rows < 8);
    hw_tile is a multiple of 128 (or the full HW extent when hw <= 128).
    """
    if rows < _SUBLANE:
        r = rows  # full extent is the only legal choice
    else:
        r = min((rows // _SUBLANE) * _SUBLANE, 1024)
        min_t = min(hw, _LANE)
        while r > _SUBLANE and r * min_t * itemsize > budget_bytes:
            r -= _SUBLANE
    if hw <= _LANE:
        t = hw  # full extent
    else:
        t = (budget_bytes // max(r * itemsize, 1)) // _LANE * _LANE
        t = max(_LANE, min(t, (hw // _LANE) * _LANE))
    return r, t


# ---------------------------------------------------------------------------
# Fused path: one kernel per batch element (slab resident in VMEM).
# ---------------------------------------------------------------------------
def _cse_fused_kernel(x_ref, wsq_t_ref, wex_ref, o_ref, *, inv_hw):
    # x_ref: (1, C, HW)   wsq_t_ref: (C, C2)   wex_ref: (C, C2)   o_ref: (1, C, HW)
    x = x_ref[0]                                                        # (C, HW) native dtype
    # f32 reduction without materializing a full f32 copy of the tile.
    mean = jnp.sum(x, axis=-1, keepdims=True, dtype=jnp.float32) * inv_hw  # (C, 1)

    # Gate math on the VPU: z1[j] = sum_c w_squeeze[j, c] * mean[c]
    wsq_t = wsq_t_ref[...].astype(jnp.float32)                          # (C, C2)
    z1 = jnp.sum(wsq_t * mean, axis=0, keepdims=True)                   # (1, C2)
    # z2[i] = sum_j w_excite[i, j] * z1[j]
    wex = wex_ref[...].astype(jnp.float32)                              # (C, C2)
    z2 = jnp.sum(wex * z1, axis=-1, keepdims=True)                      # (C, 1)
    gate = 1.0 / (1.0 + jnp.exp(-z2))                                   # sigmoid, (C, 1) f32

    o_ref[0] = (x * gate.astype(x.dtype)).astype(o_ref.dtype)


def _cse_fused(x, w_squeeze, w_excite, budgets):
    B, C, HW = x.shape
    C2 = w_squeeze.shape[0]
    itemsize = jnp.dtype(x.dtype).itemsize
    wsq_t = jnp.transpose(w_squeeze)                                    # (C, C2)

    return pl.pallas_call(
        partial(_cse_fused_kernel, inv_hw=1.0 / HW),
        out_shape=jax.ShapeDtypeStruct((B, C, HW), x.dtype),
        grid_spec=pltpu.PrefetchScalarGridSpec(
            num_scalar_prefetch=0,
            grid=(B,),
            in_specs=[
                pl.BlockSpec((1, C, HW), lambda b: (b, 0, 0)),
                pl.BlockSpec((C, C2), lambda b: (0, 0)),
                pl.BlockSpec((C, C2), lambda b: (0, 0)),
            ],
            out_specs=pl.BlockSpec((1, C, HW), lambda b: (b, 0, 0)),
        ),
        compiler_params=pltpu.CompilerParams(
            dimension_semantics=("parallel",),
            vmem_limit_bytes=budgets["vmem_limit"]),
        cost_estimate=pl.CostEstimate(
            flops=2 * B * C * HW + 4 * B * C * C2,
            transcendentals=B * C,
            bytes_accessed=2 * B * C * HW * itemsize + 2 * B * C * C2 * 4),
    )(x, wsq_t, w_excite)


# ---------------------------------------------------------------------------
# Fallback path: two tiled kernels over a flattened (B*C, HW) view.
# ---------------------------------------------------------------------------
def _row_sum_kernel(x_ref, s_ref, *, tile_hw, hw, needs_mask):
    # x_ref: (R, T)   s_ref: (R, 1) f32 accumulator (resident across the t axis)
    t = pl.program_id(1)
    n_t = pl.num_programs(1)

    @pl.when(t == 0)
    def _():
        s_ref[...] = jnp.zeros_like(s_ref)

    if needs_mask:
        # Mask only on the final (partial) HW tile; all other tiles take the
        # cheap unmasked path.
        @pl.when(t == n_t - 1)
        def _():
            x = x_ref[...]
            col = jax.lax.broadcasted_iota(jnp.int32, x.shape, 1) + t * tile_hw
            x = jnp.where(col < hw, x, jnp.zeros_like(x))
            s_ref[...] += jnp.sum(x, axis=-1, keepdims=True, dtype=jnp.float32)

        @pl.when(t != n_t - 1)
        def _():
            s_ref[...] += jnp.sum(x_ref[...], axis=-1, keepdims=True,
                                  dtype=jnp.float32)
    else:
        s_ref[...] += jnp.sum(x_ref[...], axis=-1, keepdims=True,
                              dtype=jnp.float32)


def _scale_kernel(x_ref, g_ref, o_ref):
    # x_ref: (R, T)   g_ref: (R, 1) f32   o_ref: (R, T)
    x = x_ref[...]
    o_ref[...] = (x * g_ref[...].astype(x.dtype)).astype(o_ref.dtype)


def _cse_two_stage(x, w_squeeze, w_excite, budgets):
    B, C, HW = x.shape
    itemsize = jnp.dtype(x.dtype).itemsize
    BC = B * C
    x2 = x.reshape(BC, HW)                      # pack sublanes even when C < 8

    R, T = _pick_tiles(BC, HW, itemsize, budgets["block_budget"])
    nR = pl.cdiv(BC, R)
    nT = pl.cdiv(HW, T)
    needs_mask = (HW % T) != 0

    # ---- Stage 1: per-row (= per (batch, channel)) sums over HW ------------
    sums = pl.pallas_call(
        partial(_row_sum_kernel, tile_hw=T, hw=HW, needs_mask=needs_mask),
        out_shape=jax.ShapeDtypeStruct((BC, 1), jnp.float32),
        grid_spec=pltpu.PrefetchScalarGridSpec(
            num_scalar_prefetch=0,
            grid=(nR, nT),
            in_specs=[pl.BlockSpec((R, T), lambda r, t: (r, t))],
            out_specs=pl.BlockSpec((R, 1), lambda r, t: (r, 0)),
        ),
        compiler_params=pltpu.CompilerParams(
            dimension_semantics=("parallel", "arbitrary"),
            vmem_limit_bytes=budgets["vmem_limit"]),
        cost_estimate=pl.CostEstimate(
            flops=BC * HW, transcendentals=0,
            bytes_accessed=BC * HW * itemsize + BC * 4),
    )(x2)

    # ---- Tiny gate math, batched over B (plain JAX) -------------------------
    mean = sums.reshape(B, C) * (1.0 / HW)                          # (B, C) f32
    z = mean @ w_squeeze.astype(jnp.float32).T                      # (B, C//2)
    z = z @ w_excite.astype(jnp.float32).T                          # (B, C)
    gate = jax.nn.sigmoid(z).reshape(BC, 1)                         # (BC, 1) f32

    # ---- Stage 2: tiled elementwise scale -----------------------------------
    out = pl.pallas_call(
        _scale_kernel,
        out_shape=jax.ShapeDtypeStruct((BC, HW), x.dtype),
        grid_spec=pltpu.PrefetchScalarGridSpec(
            num_scalar_prefetch=0,
            grid=(nR, nT),
            in_specs=[
                pl.BlockSpec((R, T), lambda r, t: (r, t)),
                pl.BlockSpec((R, 1), lambda r, t: (r, 0)),
            ],
            out_specs=pl.BlockSpec((R, T), lambda r, t: (r, t)),
        ),
        compiler_params=pltpu.CompilerParams(
            dimension_semantics=("parallel", "parallel"),
            vmem_limit_bytes=budgets["vmem_limit"]),
        cost_estimate=pl.CostEstimate(
            flops=BC * HW, transcendentals=0,
            bytes_accessed=2 * BC * HW * itemsize + BC * 4),
    )(x2, gate)

    return out.reshape(B, C, HW)


# ---------------------------------------------------------------------------
# Public wrapper.
# ---------------------------------------------------------------------------
def cse_forward(u, w_squeeze, w_excite, *, force_two_stage=False):
    """u: (B, C, H, W); w_squeeze: (C//2, C); w_excite: (C, C//2)."""
    B, C, H, W = u.shape
    HW = H * W
    itemsize = jnp.dtype(u.dtype).itemsize
    budgets = _vmem_budgets()

    x = u.reshape(B, C, HW)
    slab_bytes = C * HW * itemsize

    if (slab_bytes <= budgets["fused_slab"]) and not force_two_stage:
        out = _cse_fused(x, w_squeeze, w_excite, budgets)
    else:
        out = _cse_two_stage(x, w_squeeze, w_excite, budgets)
    return out.reshape(B, C, H, W)


def cse_reference(u, w_squeeze, w_excite):
    # Pure-JAX reference mirroring the PyTorch forward.
    z = jnp.mean(u, axis=(2, 3), keepdims=True)            # (B, C, 1, 1)
    z = jnp.einsum('oc,bcij->boij', w_squeeze, z)           # (B, C//2, 1, 1)
    z = jnp.einsum('oc,bcij->boij', w_excite, z)            # (B, C, 1, 1)
    z = jax.nn.sigmoid(z)
    return u * z


if __name__ == "__main__":
    B, C, H, W = 2, 4, 16, 16
    key = jax.random.PRNGKey(0)
    k_u, k_w1, k_w2 = jax.random.split(key, 3)

    # Deterministic synthetic parameters (shapes from nn.Conv2d(..., 1, bias=False)).
    u = jax.random.normal(k_u, (B, C, H, W), dtype=jnp.float32)
    w_squeeze = 0.1 * jax.random.normal(k_w1, (C // 2, C), dtype=jnp.float32)
    w_excite = 0.1 * jax.random.normal(k_w2, (C, C // 2), dtype=jnp.float32)

    ref = cse_reference(u, w_squeeze, w_excite)

    # Fused (single-kernel) path — taken for this shape.
    out = jax.block_until_ready(cse_forward(u, w_squeeze, w_excite))
    assert out.shape == (B, C, H, W)
    assert jnp.allclose(out, ref, atol=1e-5, rtol=1e-5)

    # Tiled two-stage fallback path — exercised explicitly for coverage.
    out2 = jax.block_until_ready(
        cse_forward(u, w_squeeze, w_excite, force_two_stage=True))
    assert jnp.allclose(out2, ref, atol=1e-5, rtol=1e-5)

    print("KERNEL_OK")
</pallas_src>

<mosaic_0001>
module attributes {stable_mosaic.version = 11 : i64} {
  func.func @_cse_fused_kernel(%arg0: i32, %arg1: memref<1x4x256xf32, #tpu.memory_space<vmem>>, %arg2: memref<4x2xf32, #tpu.memory_space<vmem>>, %arg3: memref<4x2xf32, #tpu.memory_space<vmem>>, %arg4: memref<1x4x256xf32, #tpu.memory_space<vmem>>) attributes {dimension_semantics = [#tpu.dimension_semantics<parallel>], iteration_bounds = array<i64: 2>, scalar_prefetch = 0 : i64, scratch_operands = 0 : i64, tpu.core_type = #tpu.core_type<tc>, window_params = [{transform_indices = @transform_0, window_bounds = array<i64: 1, 4, 256>}, {pipeline_mode = #tpu.pipeline_mode<synchronous>, transform_indices = @transform_1, window_bounds = array<i64: 4, 2>}, {pipeline_mode = #tpu.pipeline_mode<synchronous>, transform_indices = @transform_2, window_bounds = array<i64: 4, 2>}, {transform_indices = @transform_3, window_bounds = array<i64: 1, 4, 256>}]} {
    %c0 = arith.constant 0 : index
    %c0_0 = arith.constant 0 : index
    %c0_1 = arith.constant 0 : index
    %0 = vector.load %arg1[%c0, %c0_0, %c0_1] : memref<1x4x256xf32, #tpu.memory_space<vmem>>, vector<1x4x256xf32>
    %1 = vector.shape_cast %0 : vector<1x4x256xf32> to vector<4x256xf32>
    %cst = arith.constant dense<0.000000e+00> : vector<4xf32>
    %2 = vector.multi_reduction <add>, %1, %cst [1] : vector<4x256xf32> to vector<4xf32>
    %3 = vector.shape_cast %2 : vector<4xf32> to vector<4x1xf32>
    %cst_2 = arith.constant 3.906250e-03 : f32
    %4 = vector.broadcast %cst_2 : f32 to vector<4x1xf32>
    %5 = arith.mulf %3, %4 : vector<4x1xf32>
    %c0_3 = arith.constant 0 : index
    %c0_4 = arith.constant 0 : index
    %6 = vector.load %arg2[%c0_3, %c0_4] : memref<4x2xf32, #tpu.memory_space<vmem>>, vector<4x2xf32>
    %7 = vector.broadcast %5 : vector<4x1xf32> to vector<4x2xf32>
    %8 = arith.mulf %6, %7 : vector<4x2xf32>
    %cst_5 = arith.constant dense<0.000000e+00> : vector<2xf32>
    %9 = vector.multi_reduction <add>, %8, %cst_5 [0] : vector<4x2xf32> to vector<2xf32>
    %10 = vector.shape_cast %9 : vector<2xf32> to vector<1x2xf32>
    %c0_6 = arith.constant 0 : index
    %c0_7 = arith.constant 0 : index
    %11 = vector.load %arg3[%c0_6, %c0_7] : memref<4x2xf32, #tpu.memory_space<vmem>>, vector<4x2xf32>
    %12 = vector.broadcast %10 : vector<1x2xf32> to vector<4x2xf32>
    %13 = arith.mulf %11, %12 : vector<4x2xf32>
    %cst_8 = arith.constant dense<0.000000e+00> : vector<4xf32>
    %14 = vector.multi_reduction <add>, %13, %cst_8 [1] : vector<4x2xf32> to vector<4xf32>
    %15 = vector.shape_cast %14 : vector<4xf32> to vector<4x1xf32>
    %cst_9 = arith.constant 0.000000e+00 : f32
    %16 = vector.broadcast %cst_9 : f32 to vector<4x1xf32>
    %17 = arith.subf %16, %15 : vector<4x1xf32>
    %18 = math.exp %17 : vector<4x1xf32>
    %cst_10 = arith.constant 1.000000e+00 : f32
    %19 = vector.broadcast %cst_10 : f32 to vector<4x1xf32>
    %20 = arith.addf %19, %18 : vector<4x1xf32>
    %cst_11 = arith.constant 1.000000e+00 : f32
    %21 = vector.broadcast %cst_11 : f32 to vector<4x1xf32>
    %22 = arith.divf %21, %20 : vector<4x1xf32>
    %23 = vector.broadcast %22 : vector<4x1xf32> to vector<4x256xf32>
    %24 = arith.mulf %1, %23 : vector<4x256xf32>
    %c0_12 = arith.constant 0 : index
    %c0_13 = arith.constant 0 : index
    %c0_14 = arith.constant 0 : index
    %25 = vector.load %arg4[%c0_12, %c0_13, %c0_14] : memref<1x4x256xf32, #tpu.memory_space<vmem>>, vector<1x4x256xf32>
    %26 = vector.shape_cast %25 : vector<1x4x256xf32> to vector<4x256xf32>
    %27 = vector.shape_cast %24 : vector<4x256xf32> to vector<1x4x256xf32>
    tpu.vector_store %arg4[%c0_12, %c0_13, %c0_14], %27 {strides = array<i32>} : memref<1x4x256xf32, #tpu.memory_space<vmem>>, vector<1x4x256xf32>,
    return
  }
  func.func @transform_0(%arg0: i32) -> (i32, i32, i32) {
    %c0_i32 = arith.constant 0 : i32
    %c0_i32_0 = arith.constant 0 : i32
    %c0_i32_1 = arith.constant 0 : i32
    return %arg0, %c0_i32, %c0_i32_0 : i32, i32, i32
  }
  func.func @transform_1(%arg0: i32) -> (i32, i32) {
    %c0_i32 = arith.constant 0 : i32
    %c0_i32_0 = arith.constant 0 : i32
    %c0_i32_1 = arith.constant 0 : i32
    return %c0_i32, %c0_i32_0 : i32, i32
  }
  func.func @transform_2(%arg0: i32) -> (i32, i32) {
    %c0_i32 = arith.constant 0 : i32
    %c0_i32_0 = arith.constant 0 : i32
    %c0_i32_1 = arith.constant 0 : i32
    return %c0_i32, %c0_i32_0 : i32, i32
  }
  func.func @transform_3(%arg0: i32) -> (i32, i32, i32) {
    %c0_i32 = arith.constant 0 : i32
    %c0_i32_0 = arith.constant 0 : i32
    %c0_i32_1 = arith.constant 0 : i32
    return %arg0, %c0_i32, %c0_i32_0 : i32, i32, i32
  }
}

</mosaic_0001>

<llo_original>
// kernel: tpu_custom_call.1
$region0: #{tpu_custom_call.1}
  #allocation0 [shape = 'u32[]', space=smem, size = 0x4, offset = 0x4, fixed_abs, tag = 'smem constant byte address 0x4 - core index']
  #allocation1 [shape = 'u32[72,128]{1,0:T(1,128)}', space=vmem, size = 0x9000, scoped, tag = 'internal scratch']
  %s0 = inlined_call_operand.hbm [shape: f32[2,4,256], index: 0, kind: input, shape index: {}]
  %s1 = inlined_call_operand.vmem [shape: f32[4,2], index: 1, kind: input, shape index: {}]
  %s2 = inlined_call_operand.vmem [shape: f32[4,2], index: 2, kind: input, shape index: {}]
  %s3 = inlined_call_operand.hbm [shape: f32[2,4,256], index: 3, kind: output, shape index: {}]
  %s4 = sld [smem:[#allocation0]]
  $region49: #{tpu_custom_call.1} parent=0
    _
  %s6 = ssub.s32 1, %s4
  %s7 = scalar_select 0, %s6, %s4
  $region1: #{tpu_custom_call.1} parent=0
    #allocation2 [shape = 'u8[8192]{0}', space=vmem, size = 0x2000, scoped, tag = 'input window, operand 0']
    #allocation3 [shape = 's32[2]{0}', space=sflag, size = 0x8, scoped, tag = 'scoped memory for tpu_custom_call.1']
    #allocation4 [shape = 's32[2]{0}', space=sflag, size = 0x8, scoped, tag = 'scoped memory for tpu_custom_call.1']
    #allocation5 [shape = 'u8[8192]{0}', space=vmem, size = 0x2000, scoped, tag = 'output window, operand 0']
    %8 = vsyncpa [#allocation3], 0
    %s9 = scalar_lea.sflag [#allocation3], 1
    %10 = vsyncpa %s9, 0
    %11 = vsyncpa [#allocation4], 0
    %s12 = scalar_lea.sflag [#allocation4], 1
    %13 = vsyncpa %s12, 0
    loop: start=0, step=1, limit=4
    $region2: #{tpu_custom_call.1} parent=1 // loop_pre_header
      _
    $region3: #{tpu_custom_call.1} parent=1 // loop_header
      %s15 = sphi 0, %s19
      %p16 = scmp.ge.s32.totalorder %s15, 4
      %s25 = sphi 0, %s27
      %s28 = sphi 0, %s25
      %s29 = sphi 0, %s28
      %s45 = sphi 0, %s29
      %s49 = sphi 0, %s49
      %s51 = sphi 0, %s49
      %s52 = sphi 0, %s51
      %s66 = sphi 0, %s52
      %s70 = sphi 0, %s70
      %s72 = sphi 0, %s70
      %s73 = sphi 0, %s72
      %s87 = sphi 0, %s73
      %s93 = sphi 0, %s95
      %s96 = sphi 0, %s93
      %s97 = sphi 0, %s96
      %s113 = sphi 0, %s97
    $region4: #{tpu_custom_call.1} parent=1 // loop_header_branch
      %18 = sbr.rel (%p16) target = $region8
    $region5: #{tpu_custom_call.1} parent=1 // loop_body
      %s20 = ssub.s32 %s15, 1
      %s21 = ssub.s32 %s15, 2
      %s22 = sadd.s32 %s15, 1
      %s23 = ssub.s32 %s15, %s22
      %p24 = scmp.eq.s32.totalorder %s23, 0
      %s26 = sadd.s32 %s25, 1
      %s27 = scalar_select %p24, %s25, %s26
      %p30 = pneg %p24
      %p31 = scmp.eq.s32.totalorder %s15, 1
      %p32 = por %p30, %p31
      %p33 = scmp.ne.s32.totalorder %s25, %s28
      %p34 = scmp.eq.s32.totalorder %s15, 0
      %p35 = por %p33, %p34
      %p36 = scmp.ne.s32.totalorder %s25, %s28
      %p37 = scmp.eq.s32.totalorder %s20, 1
      %p38 = por %p36, %p37
      %p39 = scmp.ne.s32.totalorder %s28, %s29
      %p40 = scmp.eq.s32.totalorder %s20, 0
      %p41 = por %p39, %p40
      %p42 = scmp.ne.s32.totalorder %s28, %s29
      %p43 = scmp.eq.s32.totalorder %s21, 1
      %p44 = por %p42, %p43
      %p46 = scmp.ne.s32.totalorder %s29, %s45
      %p47 = scmp.eq.s32.totalorder %s21, 0
      %p48 = por %p46, %p47
      %s50 = sadd.s32 %s49, 1
      %p53 = scmp.eq.s32.totalorder %s15, 1
      %p54 = scmp.ne.s32.totalorder %s49, %s51
      %p55 = scmp.eq.s32.totalorder %s15, 0
      %p56 = por %p54, %p55
      %p57 = scmp.ne.s32.totalorder %s49, %s51
      %p58 = scmp.eq.s32.totalorder %s20, 1
      %p59 = por %p57, %p58
      %p60 = scmp.ne.s32.totalorder %s51, %s52
      %p61 = scmp.eq.s32.totalorder %s20, 0
      %p62 = por %p60, %p61
      %p63 = scmp.ne.s32.totalorder %s51, %s52
      %p64 = scmp.eq.s32.totalorder %s21, 1
      %p65 = por %p63, %p64
      %p67 = scmp.ne.s32.totalorder %s52, %s66
      %p68 = scmp.eq.s32.totalorder %s21, 0
      %p69 = por %p67, %p68
      %s71 = sadd.s32 %s70, 1
      %p74 = scmp.eq.s32.totalorder %s15, 1
      %p75 = scmp.ne.s32.totalorder %s70, %s72
      %p76 = scmp.eq.s32.totalorder %s15, 0
      %p77 = por %p75, %p76
      %p78 = scmp.ne.s32.totalorder %s70, %s72
      %p79 = scmp.eq.s32.totalorder %s20, 1
      %p80 = por %p78, %p79
      %p81 = scmp.ne.s32.totalorder %s72, %s73
      %p82 = scmp.eq.s32.totalorder %s20, 0
      %p83 = por %p81, %p82
      %p84 = scmp.ne.s32.totalorder %s72, %s73
      %p85 = scmp.eq.s32.totalorder %s21, 1
      %p86 = por %p84, %p85
      %p88 = scmp.ne.s32.totalorder %s73, %s87
      %p89 = scmp.eq.s32.totalorder %s21, 0
      %p90 = por %p88, %p89
      %s91 = ssub.s32 %s15, %s22
      %p92 = scmp.eq.s32.totalorder %s91, 0
      %s94 = sadd.s32 %s93, 1
      %s95 = scalar_select %p92, %s93, %s94
      %p98 = pneg %p92
      %p99 = scmp.eq.s32.totalorder %s15, 1
      %p100 = por %p98, %p99
      %p101 = scmp.ne.s32.totalorder %s93, %s96
      %p102 = scmp.eq.s32.totalorder %s15, 0
      %p103 = por %p101, %p102
      %p104 = scmp.ne.s32.totalorder %s93, %s96
      %p105 = scmp.eq.s32.totalorder %s20, 1
      %p106 = por %p104, %p105
      %p107 = scmp.ne.s32.totalorder %s96, %s97
      %p108 = scmp.eq.s32.totalorder %s20, 0
      %p109 = por %p107, %p108
      %p110 = scmp.ne.s32.totalorder %s96, %s97
      %p111 = scmp.eq.s32.totalorder %s21, 1
      %p112 = por %p110, %p111
      %p114 = scmp.ne.s32.totalorder %s97, %s113
      %p115 = scmp.eq.s32.totalorder %s21, 0
      %p116 = por %p114, %p115
      %p117 = scmp.le.s32.totalorder 1, %s15
      %p118 = scmp.lt.s32.totalorder %s15, 3
      %p119 = pnand %p117, %p118
      %p120 = pneg %p119
      // Predicated region
      $region9: #{tpu_custom_call.1} parent=5 // pred_check
        _
      $region10: #{tpu_custom_call.1} parent=5 // pred_check_branch
        %122 = sbr.rel (%p119) target = $region12
      $region11: #{tpu_custom_call.1} parent=5 // pred_region
        %s123 = ssub.s32 %s15, 1
        // Predicated region
        $region13: #{tpu_custom_call.1} parent=11 // pred_check
          %p124 = pneg %p62
        $region14: #{tpu_custom_call.1} parent=11 // pred_check_branch
          %126 = sbr.rel (%p124) target = $region16
        $region15: #{tpu_custom_call.1} parent=11 // pred_region
          _
        $region16: #{tpu_custom_call.1} parent=11 // pred_fallthru
          _
        // Predicated region
        $region17: #{tpu_custom_call.1} parent=11 // pred_check
          %p127 = pneg %p83
        $region18: #{tpu_custom_call.1} parent=11 // pred_check_branch
          %129 = sbr.rel (%p127) target = $region20
        $region19: #{tpu_custom_call.1} parent=11 // pred_region
          _
        $region20: #{tpu_custom_call.1} parent=11 // pred_fallthru
          _
      $region12: #{tpu_custom_call.1} parent=5 // pred_fallthru
        _
      %p130 = scmp.lt.s32.totalorder %s15, 2
      // Predicated region
      $region21: #{tpu_custom_call.1} parent=5 // pred_check
        %p131 = pneg %p130
      $region22: #{tpu_custom_call.1} parent=5 // pred_check_branch
        %133 = sbr.rel (%p131) target = $region24
      $region23: #{tpu_custom_call.1} parent=5 // pred_region
        // Predicated region
        $region25: #{tpu_custom_call.1} parent=23 // pred_check
          %p134 = pneg %p35
        $region26: #{tpu_custom_call.1} parent=23 // pred_check_branch
          %136 = sbr.rel (%p134) target = $region28
        $region27: #{tpu_custom_call.1} parent=23 // pred_region
          %s137 = sand.u32 %s25, 1
          %s138 = scalar_lea.sflag [#allocation3], %s137
          %s139 = sand.u32 %s25, 1
          %s140 = smul.addr %s139, 8
          %s141 = scalar_lea.vmem [#allocation2], %s140
          %143 = vsyncadd %s138, 0
          %s144 = smul.addr %s15, 2
          %s145 = smul.addr %s144, 4
          %s146 = scalar_lea.hbm %s0, %s145
          %s148 = sshll.u32 %s146, 4
          %s149 = int_to_ptr.hbm [resolvable:$true] %s148
          %s150 = sshll.u32 %s141, 4
          %s151 = int_to_ptr.vmem [resolvable:$true] %s150
          %153 = dma.hbm_to_vmem [thread:$0]  %s149, 128, %s151, %s138
        $region28: #{tpu_custom_call.1} parent=23 // pred_fallthru
          _
      $region24: #{tpu_custom_call.1} parent=5 // pred_fallthru
        _
      %p154 = scmp.le.s32.totalorder 1, %s15
      %p155 = scmp.lt.s32.totalorder %s15, 3
      %p156 = pnand %p154, %p155
      %p157 = pneg %p156
      // Predicated region
      $region29: #{tpu_custom_call.1} parent=5 // pred_check
        _
      $region30: #{tpu_custom_call.1} parent=5 // pred_check_branch
        %159 = sbr.rel (%p156) target = $region32
      $region31: #{tpu_custom_call.1} parent=5 // pred_region
        %s160 = ssub.s32 %s15, 1
        %s161 = sand.u32 %s28, 1
        %s162 = scalar_lea.sflag [#allocation3], %s161
        %s163 = sand.u32 %s28, 1
        %s164 = smul.addr %s163, 8
        %s165 = scalar_lea.vmem [#allocation2], %s164
        // Predicated region
        $region33: #{tpu_custom_call.1} parent=31 // pred_check
          %p166 = pneg %p41
        $region34: #{tpu_custom_call.1} parent=31 // pred_check_branch
          %168 = sbr.rel (%p166) target = $region36
        $region35: #{tpu_custom_call.1} parent=31 // pred_region
          %170 = dma.done %s162, 128
        $region36: #{tpu_custom_call.1} parent=31 // pred_fallthru
          _
        %s171 = sand.u32 %s28, 1
        %s172 = scalar_lea.sflag [#allocation3], %s171
        %s173 = sand.u32 %s28, 1
        %s174 = smul.addr %s173, 8
        %s175 = scalar_lea.vmem [#allocation2], %s174
        %p176 = pneg %p41
        %p177 = pneg %p38
        %p178 = pneg %p62
        %p179 = pneg %p59
        %p180 = pneg %p83
        %p181 = pneg %p80
        %p182 = pneg %p109
        %p183 = pneg %p106
        %s184 = sand.u32 %s96, 1
        %s185 = scalar_lea.sflag [#allocation4], %s184
        %s186 = sand.u32 %s96, 1
        %s187 = smul.addr %s186, 8
        %s188 = scalar_lea.vmem [#allocation5], %s187
        %v189 = vld [vmem:[%s165] sm:$0xff]
        %191 = vst [vmem:[#allocation1] ss:$2 sm:$0xff] %v189
        %v192 = vld.sshfl [vmem:[#allocation1] sm:$0xff pattern:$0x75316420]
        %v193 = vld.sshfl [vmem:[#allocation1 + $0x8] sm:$0xff pattern:$0x75316420]
        %vm196 = vcmask 1043456
        %v197 = vsel %vm196, %v192, 0.0
        %v198 = vsel %vm196, %v193, 0.0
        %v199 = vadd.f32 %v197, %v198
        %200 = vadd.xlane.f32.xlu0 %v199
        %v201 = vpop.xlane.xlu0 %200
        %v202 = vmul.f32 %v201, 0.00390625
        %v203 = vld [vmem:[%s1] sm:$0xf]
        %v204 = vmul.f32 %v203, %v202
        %vm205 = vcmask 11264
        %v206 = vsel %vm205, %v204, 0.0
        %v207 = vrot.slane %v206, 4
        %v208 = vadd.f32 %v206, %v207
        %v209 = vrot.slane %v208, 2
        %v210 = vadd.f32 %v208, %v209
        %v211 = vrot.slane %v210, 1
        %v212 = vadd.f32 %v210, %v211
        %v213 = vld [vmem:[%s2] sm:$0xf]
        %v214 = vmul.f32 %v213, %v212
        %v215 = vsel %vm205, %v214, 0.0
        %216 = vadd.xlane.f32.xlu0 %v215
        %v217 = vpop.xlane.xlu0 %216
        %v218 = vsub.f32 0.0, %v217
        %v219 = vmul.f32 %v218, 1.442695
        %v220 = vpow.pop %v219
        %v221 = vadd.f32 %v220, 1.0
        %v222 = vrcp.pop %v221
        %v223 = vmul.f32 %v221, %v222
        %v224 = vsub.f32 1.0, %v223
        %v225 = vmul.f32 %v222, %v224
        %v226 = vadd.f32 %v222, %v225
        %vm227 = vweird.f32 %v221
        %vm228 = vweird.f32 %v222
        %vm229 = vmor %vm227, %vm228
        %v230 = vsel %vm229, %v222, %v226
        %v231 = vand.u32 2147483647, %v221
        %vm232 = vcmp.eq.f32.partialorder %v231, 8.507059e+37
        %v233 = vand.u32 %v221, 2147483648
        %v234 = vor.u32 1.1754944e-38, %v233
        %v235 = vsel %vm232, %v234, %v230
        %v236 = vmul.f32 1.0, %v235
        %v239 = vunpack.c.l.s4 839922192
        %v240 = vunpack.c.0.s8 %v239
        %v241 = vperm.slane %v236, %v240
        %v243 = vmul.f32 %v189, %v241
        %244 = vst [vmem:[%s188] sm:$0xff] %v243
        %s245 = sand.u32 %s96, 1
        %s246 = scalar_lea.sflag [#allocation4], %s245
        %s247 = sand.u32 %s96, 1
        %s248 = smul.addr %s247, 8
        %s249 = scalar_lea.vmem [#allocation5], %s248
        // Predicated region
        $region37: #{tpu_custom_call.1} parent=31 // pred_check
          %p250 = pneg %p106
        $region38: #{tpu_custom_call.1} parent=31 // pred_check_branch
          %252 = sbr.rel (%p250) target = $region40
        $region39: #{tpu_custom_call.1} parent=31 // pred_region
          %254 = vsyncadd %s246, 0
          %s255 = smul.addr %s20, 2
          %s256 = smul.addr %s255, 4
          %s257 = scalar_lea.hbm %s3, %s256
          %s259 = sshll.u32 %s249, 4
          %s260 = int_to_ptr.vmem [resolvable:$true] %s259
          %s261 = sshll.u32 %s257, 4
          %s262 = int_to_ptr.hbm [resolvable:$true] %s261
          %264 = dma.vmem_to_hbm [thread:$0]  %s260, 128, %s262, %s246
        $region40: #{tpu_custom_call.1} parent=31 // pred_fallthru
          _
      $region32: #{tpu_custom_call.1} parent=5 // pred_fallthru
        _
      %p265 = scmp.le.s32.totalorder 2, %s15
      // Predicated region
      $region41: #{tpu_custom_call.1} parent=5 // pred_check
        %p266 = pneg %p265
      $region42: #{tpu_custom_call.1} parent=5 // pred_check_branch
        %268 = sbr.rel (%p266) target = $region44
      $region43: #{tpu_custom_call.1} parent=5 // pred_region
        %s269 = ssub.s32 %s15, 2
        // Predicated region
        $region45: #{tpu_custom_call.1} parent=43 // pred_check
          %p270 = pneg %p112
        $region46: #{tpu_custom_call.1} parent=43 // pred_check_branch
          %272 = sbr.rel (%p270) target = $region48
        $region47: #{tpu_custom_call.1} parent=43 // pred_region
          %s273 = sand.u32 %s97, 1
          %s274 = scalar_lea.sflag [#allocation4], %s273
          %s275 = sand.u32 %s97, 1
          %s276 = smul.addr %s275, 8
          %s277 = scalar_lea.vmem [#allocation5], %s276
          %279 = dma.done %s274, 128
        $region48: #{tpu_custom_call.1} parent=43 // pred_fallthru
          _
      $region44: #{tpu_custom_call.1} parent=5 // pred_fallthru
        _
    $region6: #{tpu_custom_call.1} parent=1 // loop_footer
      %s19 = sadd.s32 1, %s15
    $region7: #{tpu_custom_call.1} parent=1 // loop_footer_branch
      %14 = sbr.rel target = $region3
    $region8: #{tpu_custom_call.1} parent=1 // loop_exit
      _
    %280 = vsyncpa [#allocation3], 1
    %s281 = scalar_lea.sflag [#allocation3], 1
    %282 = vsyncpa %s281, 1
    %283 = vsyncpa [#allocation4], 1
    %s284 = scalar_lea.sflag [#allocation4], 1
    %285 = vsyncpa %s284, 1

</llo_original>
